<compile_context>
chip_gen: v7x
topology: tpu7x:2x2x1
jax: 0.10.0
libtpu: 0.0.40
codegen_flags: <defaults>
</compile_context>

<pallas_src>
import functools

import jax
import jax.numpy as jnp
from jax.experimental import pallas as pl
from jax.experimental.pallas import tpu as pltpu


def qnet_kernel(x_ref, w01_ref, b1_ref, w2_ref, b2_ref, w3_ref, o_ref):
    # x tile: (TILE_B, 9) f32 -> cast to bf16 for the MXU; accumulate in f32.
    x = x_ref[...].astype(jnp.bfloat16)

    # Fused (Linear 9->128, no bias) o (Linear 128->128) + b1, then ReLU (f32 VPU).
    h = jnp.dot(x, w01_ref[...], preferred_element_type=jnp.float32) + b1_ref[...]
    h = jnp.maximum(h, 0.0)

    h = jnp.dot(h.astype(jnp.bfloat16), w2_ref[...],
                preferred_element_type=jnp.float32) + b2_ref[...]
    h = jnp.maximum(h, 0.0)

    o_ref[...] = jnp.dot(h.astype(jnp.bfloat16), w3_ref[...],
                         preferred_element_type=jnp.float32)   # (TILE_B, 9) f32


def _round_up(n, m):
    return ((n + m - 1) // m) * m


def prepare_kernel_params(params):
    """One-time prep: fuse layers 0/1 (exact — no activation between them) and
    cast matmul weights to bf16. Do this once; reuse across forward calls."""
    w0, w1, b1, w2, b2, w3 = params
    w01 = jnp.dot(w0, w1, preferred_element_type=jnp.float32)   # (9, 128)
    return (w01.astype(jnp.bfloat16),
            b1.astype(jnp.float32),
            w2.astype(jnp.bfloat16),
            b2.astype(jnp.float32),
            w3.astype(jnp.bfloat16))


@functools.partial(jax.jit, static_argnames=("tile_b",))
def qnet_forward(x, kernel_params, tile_b=1024):
    w01, b1, w2, b2, w3 = kernel_params
    batch = x.shape[0]
    # Keep sublane dim a multiple of 8; don't over-allocate tiles for tiny batches.
    tile_b = min(tile_b, _round_up(batch, 8))
    grid = (pl.cdiv(batch, tile_b),)

    # Weights/biases: full-extent blocks with a constant index_map -> fetched
    # once, resident in VMEM for the whole grid.
    def resident(shape):
        return pl.BlockSpec(shape, lambda i: (0, 0))

    return pl.pallas_call(
        qnet_kernel,
        out_shape=jax.ShapeDtypeStruct((batch, 9), jnp.float32),
        grid=grid,
        in_specs=[
            pl.BlockSpec((tile_b, 9), lambda i: (i, 0)),     # x: pipelined over batch
            resident(w01.shape),
            resident(b1.shape),
            resident(w2.shape),
            resident(b2.shape),
            resident(w3.shape),
        ],
        out_specs=pl.BlockSpec((tile_b, 9), lambda i: (i, 0)),
        compiler_params=pltpu.CompilerParams(
            dimension_semantics=("parallel",)),               # v7x: 2 TCs share batch
    )(x, w01, b1, w2, b2, w3)


def init_params(key):
    """Deterministic parameter init (Kaiming-uniform-style bounds, like torch defaults).
    Weights stored pre-transposed as (in, out): y = x @ W (+ b) == x @ W_torch.T + b."""
    ks = jax.random.split(key, 6)

    def unif(k, shape, fan_in):
        bound = 1.0 / jnp.sqrt(jnp.float32(fan_in))
        return jax.random.uniform(k, shape, jnp.float32, -bound, bound)

    w0 = unif(ks[0], (9, 128), 9)       # Linear(9, 128, bias=False)
    w1 = unif(ks[1], (128, 128), 128)   # Linear(128, 128, bias=True)
    b1 = unif(ks[2], (1, 128), 128)     # bias kept 2D (1, 128) for clean VMEM layout
    w2 = unif(ks[3], (128, 128), 128)   # Linear(128, 128, bias=True)
    b2 = unif(ks[4], (1, 128), 128)
    w3 = unif(ks[5], (128, 9), 128)     # Linear(128, 9, bias=False)
    return (w0, w1, b1, w2, b2, w3)


def qnet_reference_f32(x, params):
    """Exact f32 forward of the original (unfused) architecture."""
    w0, w1, b1, w2, b2, w3 = params
    h = x @ w0
    h = jnp.maximum(h @ w1 + b1, 0.0)
    h = jnp.maximum(h @ w2 + b2, 0.0)
    return h @ w3


def qnet_reference_bf16(x, kernel_params):
    """Plain-JAX reference doing the same bf16-MXU / f32-accumulate math as the kernel."""
    w01, b1, w2, b2, w3 = kernel_params
    h = jnp.dot(x.astype(jnp.bfloat16), w01, preferred_element_type=jnp.float32) + b1
    h = jnp.maximum(h, 0.0)
    h = jnp.dot(h.astype(jnp.bfloat16), w2, preferred_element_type=jnp.float32) + b2
    h = jnp.maximum(h, 0.0)
    return jnp.dot(h.astype(jnp.bfloat16), w3, preferred_element_type=jnp.float32)


if __name__ == "__main__":
    key = jax.random.PRNGKey(0)
    k_params, k_x1, k_x2 = jax.random.split(key, 3)

    params = init_params(k_params)
    kparams = prepare_kernel_params(params)

    # Small DQN-style batch (grid of 1).
    x_small = jax.random.normal(k_x1, (8, 9), jnp.float32)
    out_small = jax.block_until_ready(qnet_forward(x_small, kparams))

    # Larger batch exercising the batch grid + resident weights (grid of 4).
    x_big = jax.random.normal(k_x2, (2048, 9), jnp.float32)
    out_big = jax.block_until_ready(qnet_forward(x_big, kparams, tile_b=512))

    for x, out in ((x_small, out_small), (x_big, out_big)):
        assert out.shape == (x.shape[0], 9)

        # Tight check: same bf16-MXU math outside the kernel.
        ref_bf16 = qnet_reference_bf16(x, kparams)
        assert jnp.allclose(out, ref_bf16, atol=1e-3, rtol=1e-3), \
            "Pallas output mismatch vs bf16 reference"

        # Loose semantic check: exact f32 original (unfused) architecture.
        ref_f32 = qnet_reference_f32(x, params)
        assert jnp.allclose(out, ref_f32, atol=5e-2, rtol=5e-2), \
            "Pallas output mismatch vs f32 architecture reference"

    print("KERNEL_OK")
</pallas_src>

<mosaic_0001>
module attributes {stable_mosaic.version = 11 : i64} {
  func.func @qnet_kernel(%arg0: i32, %arg1: memref<8x9xf32, #tpu.memory_space<vmem>>, %arg2: memref<9x128xbf16, #tpu.memory_space<vmem>>, %arg3: memref<1x128xf32, #tpu.memory_space<vmem>>, %arg4: memref<128x128xbf16, #tpu.memory_space<vmem>>, %arg5: memref<1x128xf32, #tpu.memory_space<vmem>>, %arg6: memref<128x9xbf16, #tpu.memory_space<vmem>>, %arg7: memref<8x9xf32, #tpu.memory_space<vmem>>) attributes {dimension_semantics = [#tpu.dimension_semantics<parallel>], iteration_bounds = array<i64: 1>, scalar_prefetch = 0 : i64, scratch_operands = 0 : i64, tpu.core_type = #tpu.core_type<tc>, window_params = [{transform_indices = @transform_0, window_bounds = array<i64: 8, 9>}, {pipeline_mode = #tpu.pipeline_mode<synchronous>, transform_indices = @transform_1, window_bounds = array<i64: 9, 128>}, {pipeline_mode = #tpu.pipeline_mode<synchronous>, transform_indices = @transform_2, window_bounds = array<i64: 1, 128>}, {pipeline_mode = #tpu.pipeline_mode<synchronous>, transform_indices = @transform_3, window_bounds = array<i64: 128, 128>}, {pipeline_mode = #tpu.pipeline_mode<synchronous>, transform_indices = @transform_4, window_bounds = array<i64: 1, 128>}, {pipeline_mode = #tpu.pipeline_mode<synchronous>, transform_indices = @transform_5, window_bounds = array<i64: 128, 9>}, {transform_indices = @transform_6, window_bounds = array<i64: 8, 9>}]} {
    %c0 = arith.constant 0 : index
    %c0_0 = arith.constant 0 : index
    %0 = vector.load %arg1[%c0, %c0_0] : memref<8x9xf32, #tpu.memory_space<vmem>>, vector<8x9xf32>
    %1 = arith.truncf %0 : vector<8x9xf32> to vector<8x9xbf16>
    %c0_1 = arith.constant 0 : index
    %c0_2 = arith.constant 0 : index
    %2 = vector.load %arg2[%c0_1, %c0_2] : memref<9x128xbf16, #tpu.memory_space<vmem>>, vector<9x128xbf16>
    %cst = arith.constant dense<0.000000e+00> : vector<8x128xf32>
    %3 = tpu.matmul %1, %2, %cst {dimension_numbers = #tpu.dot_dimension_numbers<[1], [0], [0], [1], [0, 0, 1, 1], [], []>} : vector<8x9xbf16>, vector<9x128xbf16>, vector<8x128xf32> -> vector<8x128xf32>
    %c0_3 = arith.constant 0 : index
    %c0_4 = arith.constant 0 : index
    %4 = vector.load %arg3[%c0_3, %c0_4] : memref<1x128xf32, #tpu.memory_space<vmem>>, vector<1x128xf32>
    %5 = vector.broadcast %4 : vector<1x128xf32> to vector<8x128xf32>
    %6 = arith.addf %3, %5 : vector<8x128xf32>
    %cst_5 = arith.constant 0.000000e+00 : f32
    %7 = vector.broadcast %cst_5 : f32 to vector<8x128xf32>
    %8 = arith.maximumf %6, %7 : vector<8x128xf32>
    %9 = arith.truncf %8 : vector<8x128xf32> to vector<8x128xbf16>
    %c0_6 = arith.constant 0 : index
    %c0_7 = arith.constant 0 : index
    %10 = vector.load %arg4[%c0_6, %c0_7] : memref<128x128xbf16, #tpu.memory_space<vmem>>, vector<128x128xbf16>
    %cst_8 = arith.constant dense<0.000000e+00> : vector<8x128xf32>
    %11 = tpu.matmul %9, %10, %cst_8 {dimension_numbers = #tpu.dot_dimension_numbers<[1], [0], [0], [1], [0, 0, 1, 1], [], []>} : vector<8x128xbf16>, vector<128x128xbf16>, vector<8x128xf32> -> vector<8x128xf32>
    %c0_9 = arith.constant 0 : index
    %c0_10 = arith.constant 0 : index
    %12 = vector.load %arg5[%c0_9, %c0_10] : memref<1x128xf32, #tpu.memory_space<vmem>>, vector<1x128xf32>
    %13 = vector.broadcast %12 : vector<1x128xf32> to vector<8x128xf32>
    %14 = arith.addf %11, %13 : vector<8x128xf32>
    %cst_11 = arith.constant 0.000000e+00 : f32
    %15 = vector.broadcast %cst_11 : f32 to vector<8x128xf32>
    %16 = arith.maximumf %14, %15 : vector<8x128xf32>
    %17 = arith.truncf %16 : vector<8x128xf32> to vector<8x128xbf16>
    %c0_12 = arith.constant 0 : index
    %c0_13 = arith.constant 0 : index
    %18 = vector.load %arg6[%c0_12, %c0_13] : memref<128x9xbf16, #tpu.memory_space<vmem>>, vector<128x9xbf16>
    %cst_14 = arith.constant dense<0.000000e+00> : vector<8x9xf32>
    %19 = tpu.matmul %17, %18, %cst_14 {dimension_numbers = #tpu.dot_dimension_numbers<[1], [0], [0], [1], [0, 0, 1, 1], [], []>} : vector<8x128xbf16>, vector<128x9xbf16>, vector<8x9xf32> -> vector<8x9xf32>
    %c0_15 = arith.constant 0 : index
    %c0_16 = arith.constant 0 : index
    %20 = vector.load %arg7[%c0_15, %c0_16] : memref<8x9xf32, #tpu.memory_space<vmem>>, vector<8x9xf32>
    tpu.vector_store %arg7[%c0_15, %c0_16], %19 {strides = array<i32>} : memref<8x9xf32, #tpu.memory_space<vmem>>, vector<8x9xf32>,
    return
  }
  func.func @transform_0(%arg0: i32) -> (i32, i32) {
    %c0_i32 = arith.constant 0 : i32
    %c0_i32_0 = arith.constant 0 : i32
    return %arg0, %c0_i32 : i32, i32
  }
  func.func @transform_1(%arg0: i32) -> (i32, i32) {
    %c0_i32 = arith.constant 0 : i32
    %c0_i32_0 = arith.constant 0 : i32
    %c0_i32_1 = arith.constant 0 : i32
    return %c0_i32, %c0_i32_0 : i32, i32
  }
  func.func @transform_2(%arg0: i32) -> (i32, i32) {
    %c0_i32 = arith.constant 0 : i32
    %c0_i32_0 = arith.constant 0 : i32
    %c0_i32_1 = arith.constant 0 : i32
    return %c0_i32, %c0_i32_0 : i32, i32
  }
  func.func @transform_3(%arg0: i32) -> (i32, i32) {
    %c0_i32 = arith.constant 0 : i32
    %c0_i32_0 = arith.constant 0 : i32
    %c0_i32_1 = arith.constant 0 : i32
    return %c0_i32, %c0_i32_0 : i32, i32
  }
  func.func @transform_4(%arg0: i32) -> (i32, i32) {
    %c0_i32 = arith.constant 0 : i32
    %c0_i32_0 = arith.constant 0 : i32
    %c0_i32_1 = arith.constant 0 : i32
    return %c0_i32, %c0_i32_0 : i32, i32
  }
  func.func @transform_5(%arg0: i32) -> (i32, i32) {
    %c0_i32 = arith.constant 0 : i32
    %c0_i32_0 = arith.constant 0 : i32
    %c0_i32_1 = arith.constant 0 : i32
    return %c0_i32, %c0_i32_0 : i32, i32
  }
  func.func @transform_6(%arg0: i32) -> (i32, i32) {
    %c0_i32 = arith.constant 0 : i32
    %c0_i32_0 = arith.constant 0 : i32
    return %arg0, %c0_i32 : i32, i32
  }
}

</mosaic_0001>

<llo_original>
// kernel: qnet_forward.1
$region0: #{qnet_forward.1}
  #allocation0 [shape = 'u32[]', space=smem, size = 0x4, offset = 0x4, fixed_abs, tag = 'smem constant byte address 0x4 - core index']
  #allocation1 [shape = 'u32[144,128]{1,0:T(1,128)}', space=vmem, size = 0x12000, scoped, tag = 'internal scratch']
  %s0 = inlined_call_operand.vmem [shape: f32[8,9], index: 0, kind: input, shape index: {}]
  %s1 = inlined_call_operand.hbm [shape: bf16[9,128], index: 1, kind: input, shape index: {}]
  %s2 = inlined_call_operand.vmem [shape: f32[1,128], index: 2, kind: input, shape index: {}]
  %s3 = inlined_call_operand.vmem [shape: bf16[128,128], index: 3, kind: input, shape index: {}]
  %s4 = inlined_call_operand.vmem [shape: f32[1,128], index: 4, kind: input, shape index: {}]
  %s5 = inlined_call_operand.vmem [shape: bf16[128,9], index: 5, kind: input, shape index: {}]
  %s6 = inlined_call_operand.hbm [shape: f32[8,9], index: 6, kind: output, shape index: {}]
  %s7 = sld [smem:[#allocation0]]
  $region38: #{qnet_forward.1} parent=0
    _
  %s9 = ssub.s32 1, %s7
  %s10 = scalar_select 0, %s9, %s7
  $region1: #{qnet_forward.1} parent=0
    #allocation2 [shape = 'u8[4096]{0}', space=vmem, size = 0x1000, scoped, tag = 'input window, operand 1, single buffered']
    #allocation3 [shape = 's32[1]{0}', space=sflag, size = 0x4, scoped, tag = 'scoped memory for qnet_forward.1']
    #allocation4 [shape = 's32[1]{0}', space=sflag, size = 0x4, scoped, tag = 'scoped memory for qnet_forward.1']
    #allocation5 [shape = 'u8[4096]{0}', space=vmem, size = 0x1000, scoped, tag = 'output window, operand 0, single buffered']
    %11 = vsyncpa [#allocation3], 0
    %12 = vsyncpa [#allocation4], 0
    // Predicated region
    $region2: #{qnet_forward.1} parent=1 // pred_check
      _
    $region3: #{qnet_forward.1} parent=1 // pred_check_branch
      %14 = sbr.rel (0) target = $region5
    $region4: #{qnet_forward.1} parent=1 // pred_region
      _
    $region5: #{qnet_forward.1} parent=1 // pred_fallthru
      _
    // Predicated region
    $region6: #{qnet_forward.1} parent=1 // pred_check
      _
    $region7: #{qnet_forward.1} parent=1 // pred_check_branch
      %16 = sbr.rel (0) target = $region9
    $region8: #{qnet_forward.1} parent=1 // pred_region
      %s18 = ssub.s32 128, 128
      %19 = vsyncadd [#allocation3], %s18
      %s20 = sshll.u32 [#allocation2], 4
      %s21 = int_to_ptr.vmem [resolvable:$true] %s20
      %26 = dma.hbm_to_vmem [thread:$0]  %s1, 128, %s21, [#allocation3], 64, 64, 4
    $region9: #{qnet_forward.1} parent=1 // pred_fallthru
      _
    // Predicated region
    $region10: #{qnet_forward.1} parent=1 // pred_check
      _
    $region11: #{qnet_forward.1} parent=1 // pred_check_branch
      %28 = sbr.rel (0) target = $region13
    $region12: #{qnet_forward.1} parent=1 // pred_region
      _
    $region13: #{qnet_forward.1} parent=1 // pred_fallthru
      _
    // Predicated region
    $region14: #{qnet_forward.1} parent=1 // pred_check
      _
    $region15: #{qnet_forward.1} parent=1 // pred_check_branch
      %30 = sbr.rel (0) target = $region17
    $region16: #{qnet_forward.1} parent=1 // pred_region
      _
    $region17: #{qnet_forward.1} parent=1 // pred_fallthru
      _
    // Predicated region
    $region18: #{qnet_forward.1} parent=1 // pred_check
      _
    $region19: #{qnet_forward.1} parent=1 // pred_check_branch
      %32 = sbr.rel (0) target = $region21
    $region20: #{qnet_forward.1} parent=1 // pred_region
      _
    $region21: #{qnet_forward.1} parent=1 // pred_fallthru
      _
    // Predicated region
    $region22: #{qnet_forward.1} parent=1 // pred_check
      _
    $region23: #{qnet_forward.1} parent=1 // pred_check_branch
      %34 = sbr.rel (0) target = $region25
    $region24: #{qnet_forward.1} parent=1 // pred_region
      _
    $region25: #{qnet_forward.1} parent=1 // pred_fallthru
      _
    // Predicated region
    $region26: #{qnet_forward.1} parent=1 // pred_check
      _
    $region27: #{qnet_forward.1} parent=1 // pred_check_branch
      %36 = sbr.rel (0) target = $region29
    $region28: #{qnet_forward.1} parent=1 // pred_region
      %37 = dma.done [#allocation3], 128
    $region29: #{qnet_forward.1} parent=1 // pred_fallthru
      _
    %v39 = vld [vmem:[%s0] sm:$0xff]
    %v40 = vpack.c.bf16 %v39, %v39
    %v41 = vld [vmem:[#allocation2] sm:$0xf]
    %v42 = vld [vmem:[#allocation2 + $0x4] sm:$0x1]
    %v43 = vld [vmem:[%s2] sm:$0x1]
    %v45 = vlaneseq
    %v46 = vshrl.u32 %v45, 7
    %v47 = vsub.s32 0, %v46
    %v48 = vrot.slane %v43, %v47
    %v52 = vunpack.c.l.b16 %v41
    %v53 = vunpack.c.l.b16 %v42
    %v54 = vpack.c.b16 %v53, %v52
    %vm55 = vcmask 72704
    %v57 = vsel %vm55, %v40, 0
    %vm59 = vcmask 1043456
    %vm60 = vcmask 1044480
    %v61 = vsel %vm59, 4294967295, 65535
    %v62 = vsel %vm60, %v61, 0
    %v64 = vand.u32 %v54, %v62
    %66 = vmatprep.subr.bf16.mxu0 0
    %67 = vmatpush1.bf16.msra.mxu0 %v64
    %68 = vmatprep.subr.bf16.mxu0 0
    %69 = vmatpush1.bf16.msra.mxu0 0
    %70 = vmatprep.subr.bf16.mxu0 0
    %71 = vmatpush1.bf16.msra.mxu0 0
    %72 = vmatprep.subr.bf16.mxu0 0
    %73 = vmatpush1.bf16.msra.mxu0 0
    %74 = vmatprep.subr.bf16.mxu0 0
    %75 = vmatpush1.bf16.msra.mxu0 0
    %76 = vmatprep.subr.bf16.mxu0 0
    %77 = vmatpush1.bf16.msra.mxu0 0
    %78 = vmatprep.subr.bf16.mxu0 0
    %79 = vmatpush1.bf16.msra.mxu0 0
    %80 = vmatprep.subr.bf16.mxu0 0
    %81 = vmatpush1.bf16.msra.mxu0 0
    %82 = vmatprep.subr.bf16.mxu0 0
    %83 = vmatpush1.bf16.msra.mxu0 0
    %84 = vmatprep.subr.bf16.mxu0 0
    %85 = vmatpush1.bf16.msra.mxu0 0
    %86 = vmatprep.subr.bf16.mxu0 0
    %87 = vmatpush1.bf16.msra.mxu0 0
    %88 = vmatprep.subr.bf16.mxu0 0
    %89 = vmatpush1.bf16.msra.mxu0 0
    %90 = vmatprep.subr.bf16.mxu0 0
    %91 = vmatpush1.bf16.msra.mxu0 0
    %92 = vmatprep.subr.bf16.mxu0 0
    %93 = vmatpush1.bf16.msra.mxu0 0
    %94 = vmatprep.subr.bf16.mxu0 0
    %95 = vmatpush1.bf16.msra.mxu0 0
    %96 = vmatprep.subr.bf16.mxu0 0
    %97 = vmatpush1.bf16.msra.mxu0 0
    %98 = vmatprep.mubr.bf16.mxu0 0
    %99 = vmatmul.mubr.bf16.gmra.mrb[0].mxu0 %v57
    %v100 = vpop.f32.mrb[0].mxu0
    %v101 = vadd.f32 %v48, %v100
    %v102 = vpop.f32.mrb[0].mxu0
    %v103 = vpop.f32.mrb[0].mxu0
    %v104 = vpop.f32.mrb[0].mxu0
    %105 = vdwg.mxu0
    %v106 = vmax.f32 %v101, 0.0
    %v107 = vpack.c.bf16 %v106, %v106
    %v108 = vld [vmem:[%s3] sm:$0xf]
    %v109 = vld [vmem:[%s3 + $0x4] sm:$0xf]
    %v110 = vld [vmem:[%s3 + $0x8] sm:$0xf]
    %v111 = vld [vmem:[%s3 + $0xc] sm:$0xf]
    %v112 = vld [vmem:[%s3 + $0x10] sm:$0xf]
    %v113 = vld [vmem:[%s3 + $0x14] sm:$0xf]
    %v114 = vld [vmem:[%s3 + $0x18] sm:$0xf]
    %v115 = vld [vmem:[%s3 + $0x1c] sm:$0xf]
    %v116 = vld [vmem:[%s3 + $0x20] sm:$0xf]
    %v117 = vld [vmem:[%s3 + $0x24] sm:$0xf]
    %v118 = vld [vmem:[%s3 + $0x28] sm:$0xf]
    %v119 = vld [vmem:[%s3 + $0x2c] sm:$0xf]
    %v120 = vld [vmem:[%s3 + $0x30] sm:$0xf]
    %v121 = vld [vmem:[%s3 + $0x34] sm:$0xf]
    %v122 = vld [vmem:[%s3 + $0x38] sm:$0xf]
    %v123 = vld [vmem:[%s3 + $0x3c] sm:$0xf]
    %v124 = vld [vmem:[%s4] sm:$0x1]
    %v126 = vlaneseq
    %v127 = vshrl.u32 %v126, 7
    %v128 = vsub.s32 0, %v127
    %v129 = vrot.slane %v124, %v128
    %v147 = vunpack.c.l.b16 %v108
    %v148 = vunpack.c.l.b16 %v109
    %v149 = vunpack.c.l.b16 %v110
    %v150 = vunpack.c.l.b16 %v111
    %v151 = vunpack.c.l.b16 %v112
    %v152 = vunpack.c.l.b16 %v113
    %v153 = vunpack.c.l.b16 %v114
    %v154 = vunpack.c.l.b16 %v115
    %v155 = vunpack.c.l.b16 %v116
    %v156 = vunpack.c.l.b16 %v117
    %v157 = vunpack.c.l.b16 %v118
    %v158 = vunpack.c.l.b16 %v119
    %v159 = vunpack.c.l.b16 %v120
    %v160 = vunpack.c.l.b16 %v121
    %v161 = vunpack.c.l.b16 %v122
    %v162 = vunpack.c.l.b16 %v123
    %v163 = vpack.c.b16 %v148, %v147
    %v164 = vpack.c.b16 %v150, %v149
    %v165 = vpack.c.b16 %v152, %v151
    %v166 = vpack.c.b16 %v154, %v153
    %v167 = vpack.c.b16 %v156, %v155
    %v168 = vpack.c.b16 %v158, %v157
    %v169 = vpack.c.b16 %v160, %v159
    %v170 = vpack.c.b16 %v162, %v161
    %179 = vmatprep.subr.bf16.mxu0 0
    %180 = vmatpush1.bf16.msra.mxu0 %v163
    %181 = vmatprep.subr.bf16.mxu0 0
    %182 = vmatpush1.bf16.msra.mxu0 %v164
    %183 = vmatprep.subr.bf16.mxu0 0
    %184 = vmatpush1.bf16.msra.mxu0 %v165
    %185 = vmatprep.subr.bf16.mxu0 0
    %186 = vmatpush1.bf16.msra.mxu0 %v166
    %187 = vmatprep.subr.bf16.mxu0 0
    %188 = vmatpush1.bf16.msra.mxu0 %v167
    %189 = vmatprep.subr.bf16.mxu0 0
    %190 = vmatpush1.bf16.msra.mxu0 %v168
    %191 = vmatprep.subr.bf16.mxu0 0
    %192 = vmatpush1.bf16.msra.mxu0 %v169
    %193 = vmatprep.subr.bf16.mxu0 0
    %194 = vmatpush1.bf16.msra.mxu0 %v170
    %195 = vmatprep.subr.bf16.mxu0 0
    %196 = vmatpush1.bf16.msra.mxu0 0
    %197 = vmatprep.subr.bf16.mxu0 0
    %198 = vmatpush1.bf16.msra.mxu0 0
    %199 = vmatprep.subr.bf16.mxu0 0
    %200 = vmatpush1.bf16.msra.mxu0 0
    %201 = vmatprep.subr.bf16.mxu0 0
    %202 = vmatpush1.bf16.msra.mxu0 0
    %203 = vmatprep.subr.bf16.mxu0 0
    %204 = vmatpush1.bf16.msra.mxu0 0
    %205 = vmatprep.subr.bf16.mxu0 0
    %206 = vmatpush1.bf16.msra.mxu0 0
    %207 = vmatprep.subr.bf16.mxu0 0
    %208 = vmatpush1.bf16.msra.mxu0 0
    %209 = vmatprep.subr.bf16.mxu0 0
    %210 = vmatpush1.bf16.msra.mxu0 0
    %211 = vmatprep.mubr.bf16.mxu0 0
    %212 = vmatmul.mubr.bf16.gmra.mrb[0].mxu0 %v107
    %v213 = vpop.f32.mrb[0].mxu0
    %v214 = vadd.f32 %v129, %v213
    %v215 = vpop.f32.mrb[0].mxu0
    %v216 = vpop.f32.mrb[0].mxu0
    %v217 = vpop.f32.mrb[0].mxu0
    %218 = vdwg.mxu0
    %v219 = vmax.f32 %v214, 0.0
    %v220 = vpack.c.bf16 %v219, %v219
    %v221 = vld [vmem:[%s5] sm:$0xf]
    %v222 = vld [vmem:[%s5 + $0x4] sm:$0xf]
    %v223 = vld [vmem:[%s5 + $0x8] sm:$0xf]
    %v224 = vld [vmem:[%s5 + $0xc] sm:$0xf]
    %v225 = vld [vmem:[%s5 + $0x10] sm:$0xf]
    %v226 = vld [vmem:[%s5 + $0x14] sm:$0xf]
    %v227 = vld [vmem:[%s5 + $0x18] sm:$0xf]
    %v228 = vld [vmem:[%s5 + $0x1c] sm:$0xf]
    %v229 = vld [vmem:[%s5 + $0x20] sm:$0xf]
    %v230 = vld [vmem:[%s5 + $0x24] sm:$0xf]
    %v231 = vld [vmem:[%s5 + $0x28] sm:$0xf]
    %v232 = vld [vmem:[%s5 + $0x2c] sm:$0xf]
    %v233 = vld [vmem:[%s5 + $0x30] sm:$0xf]
    %v234 = vld [vmem:[%s5 + $0x34] sm:$0xf]
    %v235 = vld [vmem:[%s5 + $0x38] sm:$0xf]
    %v236 = vld [vmem:[%s5 + $0x3c] sm:$0xf]
    %v253 = vunpack.c.l.b16 %v221
    %v254 = vunpack.c.l.b16 %v222
    %v255 = vunpack.c.l.b16 %v223
    %v256 = vunpack.c.l.b16 %v224
    %v257 = vunpack.c.l.b16 %v225
    %v258 = vunpack.c.l.b16 %v226
    %v259 = vunpack.c.l.b16 %v227
    %v260 = vunpack.c.l.b16 %v228
    %v261 = vunpack.c.l.b16 %v229
    %v262 = vunpack.c.l.b16 %v230
    %v263 = vunpack.c.l.b16 %v231
    %v264 = vunpack.c.l.b16 %v232
    %v265 = vunpack.c.l.b16 %v233
    %v266 = vunpack.c.l.b16 %v234
    %v267 = vunpack.c.l.b16 %v235
    %v268 = vunpack.c.l.b16 %v236
    %v269 = vpack.c.b16 %v254, %v253
    %v270 = vpack.c.b16 %v256, %v255
    %v271 = vpack.c.b16 %v258, %v257
    %v272 = vpack.c.b16 %v260, %v259
    %v273 = vpack.c.b16 %v262, %v261
    %v274 = vpack.c.b16 %v264, %v263
    %v275 = vpack.c.b16 %v266, %v265
    %v276 = vpack.c.b16 %v268, %v267
    %285 = vmatprep.subr.bf16.mxu0 0
    %286 = vmatpush1.bf16.msra.mxu0 %v269
    %287 = vmatprep.subr.bf16.mxu0 0
    %288 = vmatpush1.bf16.msra.mxu0 %v270
    %289 = vmatprep.subr.bf16.mxu0 0
    %290 = vmatpush1.bf16.msra.mxu0 %v271
    %291 = vmatprep.subr.bf16.mxu0 0
    %292 = vmatpush1.bf16.msra.mxu0 %v272
    %293 = vmatprep.subr.bf16.mxu0 0
    %294 = vmatpush1.bf16.msra.mxu0 %v273
    %295 = vmatprep.subr.bf16.mxu0 0
    %296 = vmatpush1.bf16.msra.mxu0 %v274
    %297 = vmatprep.subr.bf16.mxu0 0
    %298 = vmatpush1.bf16.msra.mxu0 %v275
    %299 = vmatprep.subr.bf16.mxu0 0
    %300 = vmatpush1.bf16.msra.mxu0 %v276
    %301 = vmatprep.subr.bf16.mxu0 0
    %302 = vmatpush1.bf16.msra.mxu0 0
    %303 = vmatprep.subr.bf16.mxu0 0
    %304 = vmatpush1.bf16.msra.mxu0 0
    %305 = vmatprep.subr.bf16.mxu0 0
    %306 = vmatpush1.bf16.msra.mxu0 0
    %307 = vmatprep.subr.bf16.mxu0 0
    %308 = vmatpush1.bf16.msra.mxu0 0
    %309 = vmatprep.subr.bf16.mxu0 0
    %310 = vmatpush1.bf16.msra.mxu0 0
    %311 = vmatprep.subr.bf16.mxu0 0
    %312 = vmatpush1.bf16.msra.mxu0 0
    %313 = vmatprep.subr.bf16.mxu0 0
    %314 = vmatpush1.bf16.msra.mxu0 0
    %315 = vmatprep.subr.bf16.mxu0 0
    %316 = vmatpush1.bf16.msra.mxu0 0
    %317 = vmatprep.mubr.bf16.mxu0 0
    %318 = vmatmul.mubr.bf16.gmra.mrb[0].mxu0 %v220
    %v319 = vpop.f32.mrb[0].mxu0
    %v320 = vadd.f32 0.0, %v319
    %v321 = vpop.f32.mrb[0].mxu0
    %v322 = vpop.f32.mrb[0].mxu0
    %v323 = vpop.f32.mrb[0].mxu0
    %324 = vdwg.mxu0
    %325 = vst.msk [vmem:[#allocation5] sm:$0xff] %vm55, %v320
    // Predicated region
    $region30: #{qnet_forward.1} parent=1 // pred_check
      _
    $region31: #{qnet_forward.1} parent=1 // pred_check_branch
      %327 = sbr.rel (0) target = $region33
    $region32: #{qnet_forward.1} parent=1 // pred_region
      %s329 = ssub.s32 128, 128
      %330 = vsyncadd [#allocation4], %s329
      %s332 = sshll.u32 [#allocation5], 4
      %s333 = int_to_ptr.vmem [resolvable:$true] %s332
      %335 = dma.vmem_to_hbm [thread:$0]  %s333, 128, %s6, [#allocation4]
    $region33: #{qnet_forward.1} parent=1 // pred_fallthru
      _
    // Predicated region
    $region34: #{qnet_forward.1} parent=1 // pred_check
      _
    $region35: #{qnet_forward.1} parent=1 // pred_check_branch
      %337 = sbr.rel (0) target = $region37
    $region36: #{qnet_forward.1} parent=1 // pred_region
      %338 = dma.done [#allocation4], 128
    $region37: #{qnet_forward.1} parent=1 // pred_fallthru
      _
    %339 = vsyncpa [#allocation3], 1
    %340 = vsyncpa [#allocation4], 1

</llo_original>
